<compile_context>
chip_gen: v6e
topology: v6e:2x2x1
jax: 0.10.0
libtpu: 0.0.40
codegen_flags: <defaults>
</compile_context>

<pallas_src>
import functools

import jax
import jax.numpy as jnp
from jax.experimental import pallas as pl
from jax.experimental.pallas import tpu as pltpu


def _round_up(x: int, m: int) -> int:
    return ((x + m - 1) // m) * m


def _round_down(x: int, m: int) -> int:
    return (x // m) * m


def _weighted_average_kernel(indices_ref, w_es_ref, inst_ref, avg_ref, w_ref,
                             *, batch_size, block_b):
    idx = indices_ref[...]                                 # (TB, N) int32
    w_es = w_es_ref[...].astype(jnp.float32)               # (TB, N, D) f32 compute
    inst = inst_ref[...].astype(jnp.float32)               # (TB, D)

    # Ragged-tail row mask (grid = cdiv(B, TB); tail rows are garbage reads and
    # their writes are dropped, but mask them anyway so no NaN/Inf is produced).
    row0 = pl.program_id(0) * block_b
    row_ids = row0 + jax.lax.broadcasted_iota(jnp.int32, idx.shape, 0)  # (TB, N)
    valid = jnp.logical_and(row_ids < batch_size, idx >= 0)

    # ---- weighting scheme: masked dot-product softmax over N (VPU + XLU) ----
    scores = jnp.sum(w_es * inst[:, None, :], axis=-1)     # (TB, N) f32
    # Large finite negative (not -inf) so an all-masked row yields a finite,
    # uniform softmax instead of NaN.
    scores = jnp.where(valid, scores, jnp.float32(-1e30))
    m = jnp.max(scores, axis=-1, keepdims=True)            # (TB, 1)
    e = jnp.exp(scores - m)                                 # (TB, N) EUP
    denom = jnp.sum(e, axis=-1, keepdims=True)              # (TB, 1)
    weights = e / denom                                      # exact; stays normalized

    # ---- weighted average: avg[b, d] = sum_n weights[b, n] * w_es[b, n, d] --
    # weights kept in f32 through the reduction; cast only at the store.
    avg = jnp.sum(weights[:, :, None] * w_es, axis=1)       # (TB, D) f32

    avg_ref[...] = avg.astype(avg_ref.dtype)
    w_ref[...] = weights.astype(w_ref.dtype)


def weighted_average(indices, w_es, instance, *, block_b=None):
    """Returns (average (B, D), weights (B, N, 1)) matching the torch module."""
    B, N, D = w_es.shape
    out_dtype = w_es.dtype
    in_itemsize = jnp.dtype(w_es.dtype).itemsize
    out_itemsize = jnp.dtype(out_dtype).itemsize

    indices = indices.astype(jnp.int32)

    # ---- generation-aware VMEM budget (64 MiB physical on v7x, 128 on v5e/v6e)
    try:
        vmem_cap = int(pltpu.get_tpu_info().vmem_capacity_bytes)
    except Exception:
        vmem_cap = 64 << 20                     # conservative fallback
    vmem_budget = max(16 << 20, (vmem_cap * 3) // 4)

    # Per-row VMEM cost: double-buffered pipeline tiles + rough f32 compute temps.
    per_row_pipeline = 2 * (N * D * in_itemsize + N * 4 + D * in_itemsize
                            + D * out_itemsize + N * out_itemsize)
    per_row_compute = 2 * N * D * 4 + 6 * N * 4 + 2 * D * 4
    per_row = per_row_pipeline + per_row_compute

    if block_b is None:
        # Target ~4 MiB of w_es per grid step (amortizes the ~0.35 us/step
        # overhead on every generation, matters most at v7x's ~3.2 TB/s).
        rows = max(1, (4 << 20) // max(1, N * D * in_itemsize))
        block_b = max(8, _round_down(rows, 8))
    block_b = max(8, _round_up(block_b, 8))

    # Fit the double-buffered working set into the budget.
    max_rows = max(8, _round_down(vmem_budget // max(1, per_row), 8))
    block_b = min(block_b, max_rows)

    # >=2 grid steps when possible so both v7x TensorCores get work.
    if B >= 16:
        block_b = min(block_b, max(8, _round_down(B // 2, 8)))

    # Final clamp: either a full-extent batch block, or a multiple of 8 <= B
    # (satisfies the (8,128) sublane rule on the 2-D blocks in both cases).
    if block_b >= B:
        block_b = B
    else:
        block_b = max(8, _round_down(min(block_b, B), 8))

    grid = (pl.cdiv(B, block_b),)

    vmem_limit = int(min(vmem_budget, max(16 << 20, block_b * per_row + (4 << 20))))

    bytes_accessed = (B * N * D * in_itemsize        # w_es (dominant)
                      + B * N * 4                    # indices
                      + B * D * in_itemsize          # instance
                      + B * D * out_itemsize         # average
                      + B * N * out_itemsize)        # weights
    cost = pl.CostEstimate(flops=4 * B * N * D,
                           transcendentals=B * N,
                           bytes_accessed=bytes_accessed)

    kernel = functools.partial(_weighted_average_kernel,
                               batch_size=B, block_b=block_b)

    avg, weights = pl.pallas_call(
        kernel,
        out_shape=(
            jax.ShapeDtypeStruct((B, D), out_dtype),
            jax.ShapeDtypeStruct((B, N), out_dtype),
        ),
        grid_spec=pltpu.PrefetchScalarGridSpec(
            num_scalar_prefetch=0,
            grid=grid,
            in_specs=[
                pl.BlockSpec((block_b, N), lambda b: (b, 0)),        # indices
                pl.BlockSpec((block_b, N, D), lambda b: (b, 0, 0)),  # w_es
                pl.BlockSpec((block_b, D), lambda b: (b, 0)),        # instance
            ],
            out_specs=[
                pl.BlockSpec((block_b, D), lambda b: (b, 0)),        # average
                pl.BlockSpec((block_b, N), lambda b: (b, 0)),        # weights
            ],
        ),
        compiler_params=pltpu.CompilerParams(
            dimension_semantics=("parallel",),
            vmem_limit_bytes=vmem_limit),
        cost_estimate=cost,
    )(indices, w_es, instance)

    # torch's .unsqueeze(2): (B, N) -> (B, N, 1). Pure reshape glue kept outside
    # the kernel so the kernel's stores stay lane-dense in N.
    return avg, weights[:, :, None]


def _reference(indices, w_es, instance):
    w_es32 = w_es.astype(jnp.float32)
    inst32 = instance.astype(jnp.float32)
    scores = jnp.sum(w_es32 * inst32[:, None, :], axis=-1)
    scores = jnp.where(indices >= 0, scores, jnp.float32(-1e30))
    weights = jax.nn.softmax(scores, axis=-1)[:, :, None]
    average = jnp.sum(weights * w_es32, axis=1)
    return average.astype(w_es.dtype), weights.astype(w_es.dtype)


if __name__ == "__main__":
    B, N, D = 2, 8, 32
    key = jax.random.PRNGKey(0)
    k1, k2 = jax.random.split(key)

    w_es = jax.random.normal(k1, (B, N, D), dtype=jnp.float32)
    instance = jax.random.normal(k2, (B, D), dtype=jnp.float32)
    # Deterministic indices; all valid (>= 0) so no padding mask fires here.
    indices = jnp.tile(jnp.arange(N, dtype=jnp.int32)[None, :], (B, 1))

    avg, weights = weighted_average(indices, w_es, instance)
    jax.block_until_ready((avg, weights))

    ref_avg, ref_w = _reference(indices, w_es, instance)
    assert avg.shape == (B, D) and weights.shape == (B, N, 1)
    assert jnp.allclose(avg, ref_avg, atol=1e-4, rtol=1e-4)
    assert jnp.allclose(weights, ref_w, atol=1e-4, rtol=1e-4)

    print("KERNEL_OK")
</pallas_src>

<mosaic_0001>
module attributes {stable_mosaic.version = 11 : i64} {
  func.func @_weighted_average_kernel(%arg0: i32, %arg1: memref<2x8xi32, #tpu.memory_space<vmem>>, %arg2: memref<2x8x32xf32, #tpu.memory_space<vmem>>, %arg3: memref<2x32xf32, #tpu.memory_space<vmem>>, %arg4: memref<2x32xf32, #tpu.memory_space<vmem>>, %arg5: memref<2x8xf32, #tpu.memory_space<vmem>>) attributes {dimension_semantics = [#tpu.dimension_semantics<parallel>], iteration_bounds = array<i64: 1>, scalar_prefetch = 0 : i64, scratch_operands = 0 : i64, tpu.core_type = #tpu.core_type<tc>, window_params = [{transform_indices = @transform_0, window_bounds = array<i64: 2, 8>}, {transform_indices = @transform_1, window_bounds = array<i64: 2, 8, 32>}, {transform_indices = @transform_2, window_bounds = array<i64: 2, 32>}, {transform_indices = @transform_3, window_bounds = array<i64: 2, 32>}, {transform_indices = @transform_4, window_bounds = array<i64: 2, 8>}]} {
    %c0 = arith.constant 0 : index
    %c0_0 = arith.constant 0 : index
    %0 = vector.load %arg1[%c0, %c0_0] : memref<2x8xi32, #tpu.memory_space<vmem>>, vector<2x8xi32>
    %c0_1 = arith.constant 0 : index
    %c0_2 = arith.constant 0 : index
    %c0_3 = arith.constant 0 : index
    %1 = vector.load %arg2[%c0_1, %c0_2, %c0_3] : memref<2x8x32xf32, #tpu.memory_space<vmem>>, vector<2x8x32xf32>
    %c0_4 = arith.constant 0 : index
    %c0_5 = arith.constant 0 : index
    %2 = vector.load %arg3[%c0_4, %c0_5] : memref<2x32xf32, #tpu.memory_space<vmem>>, vector<2x32xf32>
    %c2_i32 = arith.constant 2 : i32
    %3 = arith.muli %arg0, %c2_i32 : i32
    %4 = tpu.iota {dimensions = array<i32: 0>} : vector<2x8xi32>
    %5 = vector.broadcast %3 : i32 to vector<2x8xi32>
    %6 = arith.addi %5, %4 : vector<2x8xi32>
    %c2_i32_6 = arith.constant 2 : i32
    %7 = vector.broadcast %c2_i32_6 : i32 to vector<2x8xi32>
    %8 = arith.cmpi slt, %6, %7 : vector<2x8xi32>
    %c0_i32 = arith.constant 0 : i32
    %9 = vector.broadcast %c0_i32 : i32 to vector<2x8xi32>
    %10 = arith.cmpi sge, %0, %9 : vector<2x8xi32>
    %11 = arith.andi %8, %10 : vector<2x8xi1>
    %12 = vector.shape_cast %2 : vector<2x32xf32> to vector<2x1x32xf32>
    %13 = vector.broadcast %12 : vector<2x1x32xf32> to vector<2x8x32xf32>
    %14 = arith.mulf %1, %13 : vector<2x8x32xf32>
    %cst = arith.constant dense<0.000000e+00> : vector<2x8xf32>
    %15 = vector.multi_reduction <add>, %14, %cst [2] : vector<2x8x32xf32> to vector<2x8xf32>
    %cst_7 = arith.constant -1.000000e+30 : f32
    %16 = vector.broadcast %cst_7 : f32 to vector<2x8xf32>
    %17 = arith.select %11, %15, %16 : vector<2x8xi1>, vector<2x8xf32>
    %cst_8 = arith.constant dense<0xFF800000> : vector<2xf32>
    %18 = vector.multi_reduction <maximumf>, %17, %cst_8 [1] : vector<2x8xf32> to vector<2xf32>
    %19 = vector.shape_cast %18 : vector<2xf32> to vector<2x1xf32>
    %20 = vector.broadcast %19 : vector<2x1xf32> to vector<2x8xf32>
    %21 = arith.subf %17, %20 : vector<2x8xf32>
    %22 = math.exp %21 : vector<2x8xf32>
    %cst_9 = arith.constant dense<0.000000e+00> : vector<2xf32>
    %23 = vector.multi_reduction <add>, %22, %cst_9 [1] : vector<2x8xf32> to vector<2xf32>
    %24 = vector.shape_cast %23 : vector<2xf32> to vector<2x1xf32>
    %25 = vector.broadcast %24 : vector<2x1xf32> to vector<2x8xf32>
    %26 = arith.divf %22, %25 : vector<2x8xf32>
    %27 = vector.shape_cast %26 : vector<2x8xf32> to vector<2x8x1xf32>
    %28 = vector.broadcast %27 : vector<2x8x1xf32> to vector<2x8x32xf32>
    %29 = arith.mulf %28, %1 : vector<2x8x32xf32>
    %cst_10 = arith.constant dense<0.000000e+00> : vector<2x32xf32>
    %30 = vector.multi_reduction <add>, %29, %cst_10 [1] : vector<2x8x32xf32> to vector<2x32xf32>
    %c0_11 = arith.constant 0 : index
    %c0_12 = arith.constant 0 : index
    %31 = vector.load %arg4[%c0_11, %c0_12] : memref<2x32xf32, #tpu.memory_space<vmem>>, vector<2x32xf32>
    tpu.vector_store %arg4[%c0_11, %c0_12], %30 {strides = array<i32>} : memref<2x32xf32, #tpu.memory_space<vmem>>, vector<2x32xf32>,
    %c0_13 = arith.constant 0 : index
    %c0_14 = arith.constant 0 : index
    %32 = vector.load %arg5[%c0_13, %c0_14] : memref<2x8xf32, #tpu.memory_space<vmem>>, vector<2x8xf32>
    tpu.vector_store %arg5[%c0_13, %c0_14], %26 {strides = array<i32>} : memref<2x8xf32, #tpu.memory_space<vmem>>, vector<2x8xf32>,
    return
  }
  func.func @transform_0(%arg0: i32) -> (i32, i32) {
    %c0_i32 = arith.constant 0 : i32
    %c0_i32_0 = arith.constant 0 : i32
    return %arg0, %c0_i32 : i32, i32
  }
  func.func @transform_1(%arg0: i32) -> (i32, i32, i32) {
    %c0_i32 = arith.constant 0 : i32
    %c0_i32_0 = arith.constant 0 : i32
    %c0_i32_1 = arith.constant 0 : i32
    return %arg0, %c0_i32, %c0_i32_0 : i32, i32, i32
  }
  func.func @transform_2(%arg0: i32) -> (i32, i32) {
    %c0_i32 = arith.constant 0 : i32
    %c0_i32_0 = arith.constant 0 : i32
    return %arg0, %c0_i32 : i32, i32
  }
  func.func @transform_3(%arg0: i32) -> (i32, i32) {
    %c0_i32 = arith.constant 0 : i32
    %c0_i32_0 = arith.constant 0 : i32
    return %arg0, %c0_i32 : i32, i32
  }
  func.func @transform_4(%arg0: i32) -> (i32, i32) {
    %c0_i32 = arith.constant 0 : i32
    %c0_i32_0 = arith.constant 0 : i32
    return %arg0, %c0_i32 : i32, i32
  }
}

</mosaic_0001>

<llo_original>
// kernel: tpu_custom_call.1
$region0: #{tpu_custom_call.1}
  #allocation0 [shape = 'u32[]', space=smem, size = 0x4, offset = 0x4, fixed_abs, tag = 'smem constant byte address 0x4 - core index']
  #allocation1 [shape = 'u32[144,128]{1,0:T(1,128)}', space=vmem, size = 0x12000, scoped, tag = 'internal scratch']
  %s0 = inlined_call_operand.hbm [shape: s32[2,8], index: 0, kind: input, shape index: {}]
  %s1 = inlined_call_operand.hbm [shape: f32[2,8,32], index: 1, kind: input, shape index: {}]
  %s2 = inlined_call_operand.vmem [shape: f32[2,32], index: 2, kind: input, shape index: {}]
  %s3 = inlined_call_operand.hbm [shape: f32[2,32], index: 3, kind: output, shape index: {0}]
  %s4 = inlined_call_operand.hbm [shape: f32[2,8], index: 4, kind: output, shape index: {1}]
  %5 = xla_tuple %s3, %s4
  %s6 = sld [smem:[#allocation0]]
  $region38: #{tpu_custom_call.1} parent=0
    _
  %s8 = ssub.s32 1, %s6
  %s9 = scalar_select 0, %s8, %s6
  $region1: #{tpu_custom_call.1} parent=0
    #allocation2 [shape = 'u8[1024]{0}', space=vmem, size = 0x400, scoped, tag = 'input window, operand 0, single buffered']
    #allocation3 [shape = 's32[1]{0}', space=sflag, size = 0x4, scoped, tag = 'scoped memory for tpu_custom_call.1']
    #allocation4 [shape = 's32[1]{0}', space=sflag, size = 0x4, scoped, tag = 'scoped memory for tpu_custom_call.1']
    #allocation5 [shape = 'u8[8192]{0}', space=vmem, size = 0x2000, scoped, tag = 'input window, operand 1, single buffered']
    #allocation6 [shape = 's32[1]{0}', space=sflag, size = 0x4, scoped, tag = 'scoped memory for tpu_custom_call.1']
    #allocation7 [shape = 'u8[1024]{0}', space=vmem, size = 0x400, scoped, tag = 'output window, operand 0, single buffered']
    #allocation8 [shape = 'u8[1024]{0}', space=vmem, size = 0x400, scoped, tag = 'output window, operand 1, single buffered']
    #allocation9 [shape = 's32[1]{0}', space=sflag, size = 0x4, scoped, tag = 'scoped memory for tpu_custom_call.1']
    %10 = vsyncpa [#allocation3], 0
    %11 = vsyncpa [#allocation6], 0
    %12 = vsyncpa [#allocation4], 0
    %13 = vsyncpa [#allocation9], 0
    // Predicated region
    $region2: #{tpu_custom_call.1} parent=1 // pred_check
      _
    $region3: #{tpu_custom_call.1} parent=1 // pred_check_branch
      %15 = sbr.rel (0) target = $region5
    $region4: #{tpu_custom_call.1} parent=1 // pred_region
      %s17 = ssub.s32 32, 32
      %18 = vsyncadd [#allocation3], %s17
      %s20 = sshll.u32 [#allocation2], 4
      %s21 = int_to_ptr.vmem [resolvable:$true] %s20
      %23 = dma.hbm_to_vmem [thread:$0]  %s0, 32, %s21, [#allocation3]
    $region5: #{tpu_custom_call.1} parent=1 // pred_fallthru
      _
    // Predicated region
    $region6: #{tpu_custom_call.1} parent=1 // pred_check
      _
    $region7: #{tpu_custom_call.1} parent=1 // pred_check_branch
      %25 = sbr.rel (0) target = $region9
    $region8: #{tpu_custom_call.1} parent=1 // pred_region
      %s27 = ssub.s32 256, 256
      %28 = vsyncadd [#allocation6], %s27
      %s29 = sshll.u32 [#allocation5], 4
      %s30 = int_to_ptr.vmem [resolvable:$true] %s29
      %35 = dma.hbm_to_vmem [thread:$0]  %s1, 256, %s30, [#allocation6], 128, 128, 8
    $region9: #{tpu_custom_call.1} parent=1 // pred_fallthru
      _
    // Predicated region
    $region10: #{tpu_custom_call.1} parent=1 // pred_check
      _
    $region11: #{tpu_custom_call.1} parent=1 // pred_check_branch
      %37 = sbr.rel (0) target = $region13
    $region12: #{tpu_custom_call.1} parent=1 // pred_region
      _
    $region13: #{tpu_custom_call.1} parent=1 // pred_fallthru
      _
    // Predicated region
    $region14: #{tpu_custom_call.1} parent=1 // pred_check
      _
    $region15: #{tpu_custom_call.1} parent=1 // pred_check_branch
      %39 = sbr.rel (0) target = $region17
    $region16: #{tpu_custom_call.1} parent=1 // pred_region
      %40 = dma.done [#allocation3], 32
    $region17: #{tpu_custom_call.1} parent=1 // pred_fallthru
      _
    // Predicated region
    $region18: #{tpu_custom_call.1} parent=1 // pred_check
      _
    $region19: #{tpu_custom_call.1} parent=1 // pred_check_branch
      %42 = sbr.rel (0) target = $region21
    $region20: #{tpu_custom_call.1} parent=1 // pred_region
      %43 = dma.done [#allocation6], 256
    $region21: #{tpu_custom_call.1} parent=1 // pred_fallthru
      _
    %v44 = vld [vmem:[#allocation2] sm:$0x3]
    %v45 = vld [vmem:[#allocation5] sm:$0xff]
    %v46 = vld [vmem:[#allocation5 + $0x8] sm:$0xff]
    %v47 = vld [vmem:[%s2] sm:$0x3]
    %s48 = smul.u32 0, 2
    %v49 = vlaneseq
    %v50 = vshrl.u32 %v49, 7
    %v51 = vstv %s48
    %v52 = vadd.s32 %v51, %v50
    %vm53 = vcmp.lt.s32.totalorder %v52, 2
    %vm54 = vcmp.ge.s32.totalorder %v44, 0
    %vm55 = vmand %vm53, %vm54
    %v58 = vunpack.c.l.s4 1966171168
    %v59 = vunpack.c.0.s8 %v58
    %v60 = vlaneseq
    %v61 = vshrl.u32 %v60, 7
    %v62 = vsub.s32 %v59, %v61
    %v63 = vrot.slane %v47, %v62
    %v64 = vcombine.high %v63, %v63
    %v66 = vunpack.c.l.s4 1966171168
    %v67 = vunpack.c.0.s8 %v66
    %v68 = vlaneseq
    %v69 = vshrl.u32 %v68, 7
    %v70 = vsub.s32 %v67, %v69
    %v71 = vrot.slane %v63, %v70
    %v73 = vunpack.c.l.s4 1966171168
    %v74 = vunpack.c.0.s8 %v73
    %v75 = vlaneseq
    %v76 = vshrl.u32 %v75, 7
    %v77 = vsub.s32 %v74, %v76
    %v78 = vrot.slane %v64, %v77
    %v79 = vlaneseq
    %v80 = vshrl.u32 %v79, 7
    %v81 = vsub.s32 0, %v80
    %v82 = vrot.slane %v71, %v81
    %v83 = vlaneseq
    %v84 = vshrl.u32 %v83, 7
    %v85 = vsub.s32 0, %v84
    %v86 = vrot.slane %v78, %v85
    %v89 = vmul.f32 %v45, %v82
    %v90 = vmul.f32 %v46, %v86
    %vm91 = vcmask 261120
    %v92 = vsel %vm91, %v89, 0.0
    %93 = vadd.xlane.f32.xlu0 %v92
    %v94 = vpop.xlane.xlu0 %93
    %v95 = vsel %vm91, %v90, 0.0
    %96 = vadd.xlane.f32.xlu0 %v95
    %v97 = vpop.xlane.xlu0 %96
    %v100 = vlaneseq
    %v101 = vand.u32 %v100, 127
    %v102 = vlaneseq
    %v103 = vshrl.u32 %v102, 7
    %v104 = vsub.s32 %v101, %v103
    %v105 = vrot.slane %v94, %v104
    %v106 = vlaneseq
    %v107 = vshrl.u32 %v106, 7
    %v108 = vsub.s32 %v101, %v107
    %v109 = vrot.slane %v97, %v108
    %vm110 = vcmask 1041409
    %v111 = vsel %vm110, %v109, %v105
    %v113 = vsel %vm55, %v111, -1e+30
    %vm114 = vcmask 58368
    %v115 = vsel %vm114, %v113, -inf
    %116 = vmax.xlane.f32.xlu0 %v115
    %v117 = vpop.xlane.xlu0 %116
    %v118 = vsub.f32 %v113, %v117
    %v119 = vmul.f32 %v118, 1.442695
    %v120 = vpow.pop %v119
    %v121 = vsel %vm114, %v120, 0.0
    %122 = vadd.xlane.f32.xlu0 %v121
    %v123 = vpop.xlane.xlu0 %122
    %v124 = vrcp.pop %v123
    %v125 = vmul.f32 %v120, %v124
    %v126 = vlaneseq
    %v127 = vshrl.u32 %v126, 7
    %v128 = vsub.s32 0, %v127
    %v129 = vrot.slane %v125, %v128
    %131 = vbcast.lane.b32.xlu0 %v129, 256
    %v132 = vpop.permute.xlu0 %131
    %v133 = vlaneseq
    %v134 = vshrl.u32 %v133, 7
    %v135 = vsub.s32 1, %v134
    %v136 = vrot.slane %v125, %v135
    %138 = vbcast.lane.b32.xlu0 %v136, 256
    %v139 = vpop.permute.xlu0 %138
    %v140 = vmul.f32 %v132, %v45
    %v141 = vmul.f32 %v139, %v46
    %v142 = vsel %vm91, %v140, 0.0
    %v143 = vrot.slane %v142, 4
    %v144 = vadd.f32 %v142, %v143
    %v145 = vrot.slane %v144, 2
    %v146 = vadd.f32 %v144, %v145
    %v147 = vrot.slane %v146, 1
    %v148 = vadd.f32 %v146, %v147
    %v149 = vsel %vm91, %v141, 0.0
    %v150 = vrot.slane %v149, 4
    %v151 = vadd.f32 %v149, %v150
    %v152 = vrot.slane %v151, 2
    %v153 = vadd.f32 %v151, %v152
    %v154 = vrot.slane %v153, 1
    %v155 = vadd.f32 %v153, %v154
    %v158 = vsel %vm110, %v155, %v148
    %vm160 = vcmask 254976
    %161 = vst.msk [vmem:[#allocation7] sm:$0x3] %vm160, %v158
    %162 = vst.msk [vmem:[#allocation8] sm:$0x3] %vm114, %v125
    // Predicated region
    $region22: #{tpu_custom_call.1} parent=1 // pred_check
      _
    $region23: #{tpu_custom_call.1} parent=1 // pred_check_branch
      %164 = sbr.rel (0) target = $region25
    $region24: #{tpu_custom_call.1} parent=1 // pred_region
      %s166 = ssub.s32 32, 32
      %167 = vsyncadd [#allocation4], %s166
      %s169 = sshll.u32 [#allocation7], 4
      %s170 = int_to_ptr.vmem [resolvable:$true] %s169
      %172 = dma.vmem_to_hbm [thread:$0]  %s170, 32, %s3, [#allocation4]
    $region25: #{tpu_custom_call.1} parent=1 // pred_fallthru
      _
    // Predicated region
    $region26: #{tpu_custom_call.1} parent=1 // pred_check
      _
    $region27: #{tpu_custom_call.1} parent=1 // pred_check_branch
      %174 = sbr.rel (0) target = $region29
    $region28: #{tpu_custom_call.1} parent=1 // pred_region
      %s176 = ssub.s32 32, 32
      %177 = vsyncadd [#allocation9], %s176
      %s179 = sshll.u32 [#allocation8], 4
      %s180 = int_to_ptr.vmem [resolvable:$true] %s179
      %182 = dma.vmem_to_hbm [thread:$0]  %s180, 32, %s4, [#allocation9]
    $region29: #{tpu_custom_call.1} parent=1 // pred_fallthru
      _
    // Predicated region
    $region30: #{tpu_custom_call.1} parent=1 // pred_check
      _
    $region31: #{tpu_custom_call.1} parent=1 // pred_check_branch
      %184 = sbr.rel (0) target = $region33
    $region32: #{tpu_custom_call.1} parent=1 // pred_region
      %185 = dma.done [#allocation4], 32
    $region33: #{tpu_custom_call.1} parent=1 // pred_fallthru
      _
    // Predicated region
    $region34: #{tpu_custom_call.1} parent=1 // pred_check
      _
    $region35: #{tpu_custom_call.1} parent=1 // pred_check_branch
      %187 = sbr.rel (0) target = $region37
    $region36: #{tpu_custom_call.1} parent=1 // pred_region
      %188 = dma.done [#allocation9], 32
    $region37: #{tpu_custom_call.1} parent=1 // pred_fallthru
      _
    %189 = vsyncpa [#allocation3], 1
    %190 = vsyncpa [#allocation6], 1
    %191 = vsyncpa [#allocation4], 1
    %192 = vsyncpa [#allocation9], 1

</llo_original>
